<compile_context>
chip_gen: v5e
topology: v5e:2x2
jax: 0.10.0
libtpu: 0.0.40
codegen_flags: <defaults>
</compile_context>

<pallas_src>
import jax
import jax.numpy as jnp
from jax.experimental import pallas as pl
from jax.experimental.pallas import tpu as pltpu

LANE = 128
SUBLANE = 8
NEG_BIG = -1e30  # bias for padded output lanes -> exp underflows to exactly 0


def _round_up(n, m):
    return (n + m - 1) // m * m


def mlp_kernel(x_ref, w1_ref, b1_ref, w2_ref, b2_ref, w3_ref, b3_ref, o_ref):
    x = x_ref[...]

    # l1 + ReLU
    z = jnp.dot(x, w1_ref[...], preferred_element_type=jnp.float32) + b1_ref[...]
    z = jnp.maximum(z, 0.0)

    # l2 + ReLU
    z = jnp.dot(z, w2_ref[...], preferred_element_type=jnp.float32) + b2_ref[...]
    z = jnp.maximum(z, 0.0)

    # l3 + softmax over the (lane-padded) feature axis. Padded lanes carry a
    # large-negative bias, so they contribute exp(...) == 0 to the denominator
    # and the softmax over the real columns is exact.
    logits = jnp.dot(z, w3_ref[...], preferred_element_type=jnp.float32) + b3_ref[...]
    m = jnp.max(logits, axis=-1, keepdims=True)
    e = jnp.exp(logits - m)
    denom = jnp.sum(e, axis=-1, keepdims=True)
    r = pl.reciprocal(denom, approx=True)   # EUP slot (otherwise idle here)
    r = r * (2.0 - denom * r)               # one Newton step -> ~f32 accuracy
    o_ref[...] = (e * r).astype(o_ref.dtype)


def mlp_forward(x, w1, b1, w2, b2, w3, b3, *, tile_b=256):
    """x: [B, in]; weights stored [in, out]; biases [1, out]. Returns [B, out]."""
    B, in_dim = x.shape
    hidden = w1.shape[1]
    out_dim = w3.shape[1]

    # --- lane-dense output slab: pad output features up to a multiple of 128.
    out_pad = _round_up(out_dim, LANE)
    w3p = jnp.pad(w3, ((0, 0), (0, out_pad - out_dim)))
    b3p = jnp.pad(b3, ((0, 0), (0, out_pad - out_dim)), constant_values=NEG_BIG)

    # --- batch tiling: pad B up to a multiple of the batch tile.
    tile_b = min(tile_b, _round_up(B, SUBLANE))
    b_pad = _round_up(B, tile_b)
    xp = jnp.pad(x, ((0, b_pad - B), (0, 0)))
    grid = (b_pad // tile_b,)

    batch_map = lambda i: (i, 0)   # x / out walk along the batch axis
    full_map = lambda i: (0, 0)    # weights & biases stay resident across tiles

    out = pl.pallas_call(
        mlp_kernel,
        out_shape=jax.ShapeDtypeStruct((b_pad, out_pad), jnp.float32),
        grid_spec=pltpu.PrefetchScalarGridSpec(
            num_scalar_prefetch=0,
            grid=grid,
            in_specs=[
                pl.BlockSpec((tile_b, in_dim), batch_map),
                pl.BlockSpec((in_dim, hidden), full_map),
                pl.BlockSpec((1, hidden), full_map),
                pl.BlockSpec((hidden, hidden), full_map),
                pl.BlockSpec((1, hidden), full_map),
                pl.BlockSpec((hidden, out_pad), full_map),
                pl.BlockSpec((1, out_pad), full_map),
            ],
            out_specs=pl.BlockSpec((tile_b, out_pad), batch_map),
        ),
        compiler_params=pltpu.CompilerParams(
            dimension_semantics=("parallel",),
        ),
    )(xp, w1, b1, w2, b2, w3p, b3p)

    return out[:B, :out_dim]


def xavier_uniform(key, fan_in, fan_out, gain):
    # Matches torch.nn.init.xavier_uniform_ distribution (values differ from
    # torch's RNG stream; deterministic synthetic init).
    limit = gain * jnp.sqrt(6.0 / (fan_in + fan_out))
    return jax.random.uniform(
        key, (fan_in, fan_out), dtype=jnp.float32, minval=-limit, maxval=limit
    )


def init_params(key, input_size, hidden_size, output_size):
    gain = jnp.sqrt(2.0)  # nn.init.calculate_gain('relu')
    k1, k2, k3 = jax.random.split(key, 3)
    w1 = xavier_uniform(k1, input_size, hidden_size, gain)
    w2 = xavier_uniform(k2, hidden_size, hidden_size, gain)
    w3 = xavier_uniform(k3, hidden_size, output_size, gain)
    b1 = jnp.zeros((1, hidden_size), jnp.float32)
    b2 = jnp.zeros((1, hidden_size), jnp.float32)
    b3 = jnp.zeros((1, output_size), jnp.float32)
    return w1, b1, w2, b2, w3, b3


def mlp_ref(x, w1, b1, w2, b2, w3, b3):
    z = jax.nn.relu(x @ w1 + b1)
    z = jax.nn.relu(z @ w2 + b2)
    return jax.nn.softmax(z @ w3 + b3, axis=-1)


if __name__ == "__main__":
    input_size = 32
    hidden_size = 8
    output_size = 16
    batch = 300  # non-multiple of tile -> exercises pad/slice + multi-tile grid

    key = jax.random.PRNGKey(0)
    kx, kp = jax.random.split(key)
    x = jax.random.normal(kx, (batch, input_size), dtype=jnp.float32)
    params = init_params(kp, input_size, hidden_size, output_size)

    out = jax.block_until_ready(mlp_forward(x, *params, tile_b=128))

    ref = mlp_ref(x, *params)
    assert out.shape == (batch, output_size)
    assert jnp.allclose(out, ref, atol=1e-5, rtol=1e-5), "mismatch vs JAX reference"
    assert jnp.allclose(jnp.sum(out, axis=-1), 1.0, atol=1e-5), "softmax rows must sum to 1"

    print("KERNEL_OK")
</pallas_src>

<mosaic_0001>
module attributes {stable_mosaic.version = 11 : i64} {
  func.func @mlp_kernel(%arg0: i32, %arg1: memref<128x32xf32, #tpu.memory_space<vmem>>, %arg2: memref<32x8xf32, #tpu.memory_space<vmem>>, %arg3: memref<1x8xf32, #tpu.memory_space<vmem>>, %arg4: memref<8x8xf32, #tpu.memory_space<vmem>>, %arg5: memref<1x8xf32, #tpu.memory_space<vmem>>, %arg6: memref<8x128xf32, #tpu.memory_space<vmem>>, %arg7: memref<1x128xf32, #tpu.memory_space<vmem>>, %arg8: memref<128x128xf32, #tpu.memory_space<vmem>>) attributes {dimension_semantics = [#tpu.dimension_semantics<parallel>], iteration_bounds = array<i64: 3>, scalar_prefetch = 0 : i64, scratch_operands = 0 : i64, tpu.core_type = #tpu.core_type<tc>, window_params = [{transform_indices = @transform_0, window_bounds = array<i64: 128, 32>}, {pipeline_mode = #tpu.pipeline_mode<synchronous>, transform_indices = @transform_1, window_bounds = array<i64: 32, 8>}, {pipeline_mode = #tpu.pipeline_mode<synchronous>, transform_indices = @transform_2, window_bounds = array<i64: 1, 8>}, {pipeline_mode = #tpu.pipeline_mode<synchronous>, transform_indices = @transform_3, window_bounds = array<i64: 8, 8>}, {pipeline_mode = #tpu.pipeline_mode<synchronous>, transform_indices = @transform_4, window_bounds = array<i64: 1, 8>}, {pipeline_mode = #tpu.pipeline_mode<synchronous>, transform_indices = @transform_5, window_bounds = array<i64: 8, 128>}, {pipeline_mode = #tpu.pipeline_mode<synchronous>, transform_indices = @transform_6, window_bounds = array<i64: 1, 128>}, {transform_indices = @transform_7, window_bounds = array<i64: 128, 128>}]} {
    %c0 = arith.constant 0 : index
    %c0_0 = arith.constant 0 : index
    %0 = vector.load %arg1[%c0, %c0_0] : memref<128x32xf32, #tpu.memory_space<vmem>>, vector<128x32xf32>
    %c0_1 = arith.constant 0 : index
    %c0_2 = arith.constant 0 : index
    %1 = vector.load %arg2[%c0_1, %c0_2] : memref<32x8xf32, #tpu.memory_space<vmem>>, vector<32x8xf32>
    %cst = arith.constant dense<0.000000e+00> : vector<128x8xf32>
    %2 = tpu.matmul %0, %1, %cst {dimension_numbers = #tpu.dot_dimension_numbers<[1], [0], [0], [1], [0, 0, 1, 1], [], []>} : vector<128x32xf32>, vector<32x8xf32>, vector<128x8xf32> -> vector<128x8xf32>
    %c0_3 = arith.constant 0 : index
    %c0_4 = arith.constant 0 : index
    %3 = vector.load %arg3[%c0_3, %c0_4] : memref<1x8xf32, #tpu.memory_space<vmem>>, vector<1x8xf32>
    %4 = vector.broadcast %3 : vector<1x8xf32> to vector<128x8xf32>
    %5 = arith.addf %2, %4 : vector<128x8xf32>
    %cst_5 = arith.constant 0.000000e+00 : f32
    %6 = vector.broadcast %cst_5 : f32 to vector<128x8xf32>
    %7 = arith.maximumf %5, %6 : vector<128x8xf32>
    %c0_6 = arith.constant 0 : index
    %c0_7 = arith.constant 0 : index
    %8 = vector.load %arg4[%c0_6, %c0_7] : memref<8x8xf32, #tpu.memory_space<vmem>>, vector<8x8xf32>
    %cst_8 = arith.constant dense<0.000000e+00> : vector<128x8xf32>
    %9 = tpu.matmul %7, %8, %cst_8 {dimension_numbers = #tpu.dot_dimension_numbers<[1], [0], [0], [1], [0, 0, 1, 1], [], []>} : vector<128x8xf32>, vector<8x8xf32>, vector<128x8xf32> -> vector<128x8xf32>
    %c0_9 = arith.constant 0 : index
    %c0_10 = arith.constant 0 : index
    %10 = vector.load %arg5[%c0_9, %c0_10] : memref<1x8xf32, #tpu.memory_space<vmem>>, vector<1x8xf32>
    %11 = vector.broadcast %10 : vector<1x8xf32> to vector<128x8xf32>
    %12 = arith.addf %9, %11 : vector<128x8xf32>
    %cst_11 = arith.constant 0.000000e+00 : f32
    %13 = vector.broadcast %cst_11 : f32 to vector<128x8xf32>
    %14 = arith.maximumf %12, %13 : vector<128x8xf32>
    %c0_12 = arith.constant 0 : index
    %c0_13 = arith.constant 0 : index
    %15 = vector.load %arg6[%c0_12, %c0_13] : memref<8x128xf32, #tpu.memory_space<vmem>>, vector<8x128xf32>
    %cst_14 = arith.constant dense<0.000000e+00> : vector<128x128xf32>
    %16 = tpu.matmul %14, %15, %cst_14 {dimension_numbers = #tpu.dot_dimension_numbers<[1], [0], [0], [1], [0, 0, 1, 1], [], []>} : vector<128x8xf32>, vector<8x128xf32>, vector<128x128xf32> -> vector<128x128xf32>
    %c0_15 = arith.constant 0 : index
    %c0_16 = arith.constant 0 : index
    %17 = vector.load %arg7[%c0_15, %c0_16] : memref<1x128xf32, #tpu.memory_space<vmem>>, vector<1x128xf32>
    %18 = vector.broadcast %17 : vector<1x128xf32> to vector<128x128xf32>
    %19 = arith.addf %16, %18 : vector<128x128xf32>
    %cst_17 = arith.constant dense<0xFF800000> : vector<128xf32>
    %20 = vector.multi_reduction <maximumf>, %19, %cst_17 [1] : vector<128x128xf32> to vector<128xf32>
    %21 = vector.shape_cast %20 : vector<128xf32> to vector<128x1xf32>
    %22 = vector.broadcast %21 : vector<128x1xf32> to vector<128x128xf32>
    %23 = arith.subf %19, %22 : vector<128x128xf32>
    %24 = math.exp %23 : vector<128x128xf32>
    %cst_18 = arith.constant dense<0.000000e+00> : vector<128xf32>
    %25 = vector.multi_reduction <add>, %24, %cst_18 [1] : vector<128x128xf32> to vector<128xf32>
    %26 = vector.shape_cast %25 : vector<128xf32> to vector<128x1xf32>
    %27 = tpu.reciprocal %26 {approx = true} : vector<128x1xf32> -> vector<128x1xf32>
    %28 = arith.mulf %26, %27 : vector<128x1xf32>
    %cst_19 = arith.constant 2.000000e+00 : f32
    %29 = vector.broadcast %cst_19 : f32 to vector<128x1xf32>
    %30 = arith.subf %29, %28 : vector<128x1xf32>
    %31 = arith.mulf %27, %30 : vector<128x1xf32>
    %32 = vector.broadcast %31 : vector<128x1xf32> to vector<128x128xf32>
    %33 = arith.mulf %24, %32 : vector<128x128xf32>
    %c0_20 = arith.constant 0 : index
    %c0_21 = arith.constant 0 : index
    %34 = vector.load %arg8[%c0_20, %c0_21] : memref<128x128xf32, #tpu.memory_space<vmem>>, vector<128x128xf32>
    tpu.vector_store %arg8[%c0_20, %c0_21], %33 {strides = array<i32>} : memref<128x128xf32, #tpu.memory_space<vmem>>, vector<128x128xf32>,
    return
  }
  func.func @transform_0(%arg0: i32) -> (i32, i32) {
    %c0_i32 = arith.constant 0 : i32
    %c0_i32_0 = arith.constant 0 : i32
    return %arg0, %c0_i32 : i32, i32
  }
  func.func @transform_1(%arg0: i32) -> (i32, i32) {
    %c0_i32 = arith.constant 0 : i32
    %c0_i32_0 = arith.constant 0 : i32
    %c0_i32_1 = arith.constant 0 : i32
    return %c0_i32, %c0_i32_0 : i32, i32
  }
  func.func @transform_2(%arg0: i32) -> (i32, i32) {
    %c0_i32 = arith.constant 0 : i32
    %c0_i32_0 = arith.constant 0 : i32
    %c0_i32_1 = arith.constant 0 : i32
    return %c0_i32, %c0_i32_0 : i32, i32
  }
  func.func @transform_3(%arg0: i32) -> (i32, i32) {
    %c0_i32 = arith.constant 0 : i32
    %c0_i32_0 = arith.constant 0 : i32
    %c0_i32_1 = arith.constant 0 : i32
    return %c0_i32, %c0_i32_0 : i32, i32
  }
  func.func @transform_4(%arg0: i32) -> (i32, i32) {
    %c0_i32 = arith.constant 0 : i32
    %c0_i32_0 = arith.constant 0 : i32
    %c0_i32_1 = arith.constant 0 : i32
    return %c0_i32, %c0_i32_0 : i32, i32
  }
  func.func @transform_5(%arg0: i32) -> (i32, i32) {
    %c0_i32 = arith.constant 0 : i32
    %c0_i32_0 = arith.constant 0 : i32
    %c0_i32_1 = arith.constant 0 : i32
    return %c0_i32, %c0_i32_0 : i32, i32
  }
  func.func @transform_6(%arg0: i32) -> (i32, i32) {
    %c0_i32 = arith.constant 0 : i32
    %c0_i32_0 = arith.constant 0 : i32
    %c0_i32_1 = arith.constant 0 : i32
    return %c0_i32, %c0_i32_0 : i32, i32
  }
  func.func @transform_7(%arg0: i32) -> (i32, i32) {
    %c0_i32 = arith.constant 0 : i32
    %c0_i32_0 = arith.constant 0 : i32
    return %arg0, %c0_i32 : i32, i32
  }
}

</mosaic_0001>

<llo_original>
// kernel: tpu_custom_call.1
$region0: #{tpu_custom_call.1}
  #allocation0 [shape = 'u32[]', space=smem, size = 0x4, offset = 0x4, fixed_abs, tag = 'smem constant byte address 0x4 - core index']
  #allocation1 [shape = 'u32[72,128]{1,0:T(1,128)}', space=vmem, size = 0x9000, scoped, tag = 'internal scratch']
  %s0 = inlined_call_operand.vmem [shape: f32[384,32], index: 0, kind: input, shape index: {}]
  %s1 = inlined_call_operand.vmem [shape: f32[32,8], index: 1, kind: input, shape index: {}]
  %s2 = inlined_call_operand.vmem [shape: f32[1,8], index: 2, kind: input, shape index: {}]
  %s3 = inlined_call_operand.vmem [shape: f32[8,8], index: 3, kind: input, shape index: {}]
  %s4 = inlined_call_operand.vmem [shape: f32[1,8], index: 4, kind: input, shape index: {}]
  %s5 = inlined_call_operand.vmem [shape: f32[8,128], index: 5, kind: input, shape index: {}]
  %s6 = inlined_call_operand.vmem [shape: f32[1,128], index: 6, kind: input, shape index: {}]
  %s7 = inlined_call_operand.hbm [shape: f32[384,128], index: 7, kind: output, shape index: {}]
  %s8 = sld [smem:[#allocation0]]
  $region61: #{tpu_custom_call.1} parent=0
    _
  %s10 = ssub.s32 1, %s8
  %s11 = scalar_select 0, %s10, %s8
  $region1: #{tpu_custom_call.1} parent=0
    #allocation2 [shape = 'u8[131072]{0}', space=vmem, size = 0x20000, scoped, tag = 'output window, operand 0']
    #allocation3 [shape = 's32[2]{0}', space=sflag, size = 0x8, scoped, tag = 'scoped memory for tpu_custom_call.1']
    %12 = vsyncpa [#allocation3], 0
    %s13 = scalar_lea.sflag [#allocation3], 1
    %14 = vsyncpa %s13, 0
    loop: start=0, step=1, limit=5
    $region2: #{tpu_custom_call.1} parent=1 // loop_pre_header
      _
    $region3: #{tpu_custom_call.1} parent=1 // loop_header
      %s16 = sphi 0, %s20
      %p17 = scmp.ge.s32.totalorder %s16, 5
      %s26 = sphi 0, %s28
      %s29 = sphi 0, %s26
      %s30 = sphi 0, %s29
      %s46 = sphi 0, %s30
      %s50 = sphi 0, %s50
      %s52 = sphi 0, %s50
      %s53 = sphi 0, %s52
      %s67 = sphi 0, %s53
      %s71 = sphi 0, %s71
      %s73 = sphi 0, %s71
      %s74 = sphi 0, %s73
      %s88 = sphi 0, %s74
      %s92 = sphi 0, %s92
      %s94 = sphi 0, %s92
      %s95 = sphi 0, %s94
      %s109 = sphi 0, %s95
      %s113 = sphi 0, %s113
      %s115 = sphi 0, %s113
      %s116 = sphi 0, %s115
      %s130 = sphi 0, %s116
      %s134 = sphi 0, %s134
      %s136 = sphi 0, %s134
      %s137 = sphi 0, %s136
      %s151 = sphi 0, %s137
      %s155 = sphi 0, %s155
      %s157 = sphi 0, %s155
      %s158 = sphi 0, %s157
      %s172 = sphi 0, %s158
      %s178 = sphi 0, %s180
      %s181 = sphi 0, %s178
      %s182 = sphi 0, %s181
      %s198 = sphi 0, %s182
    $region4: #{tpu_custom_call.1} parent=1 // loop_header_branch
      %19 = sbr.rel (%p17) target = $region8
    $region5: #{tpu_custom_call.1} parent=1 // loop_body
      %s21 = ssub.s32 %s16, 1
      %s22 = ssub.s32 %s16, 2
      %s23 = sadd.s32 %s16, 1
      %s24 = ssub.s32 %s16, %s23
      %p25 = scmp.eq.s32.totalorder %s24, 0
      %s27 = sadd.s32 %s26, 1
      %s28 = scalar_select %p25, %s26, %s27
      %p31 = pneg %p25
      %p32 = scmp.eq.s32.totalorder %s16, 2
      %p33 = por %p31, %p32
      %p34 = scmp.ne.s32.totalorder %s26, %s29
      %p35 = scmp.eq.s32.totalorder %s16, 0
      %p36 = por %p34, %p35
      %p37 = scmp.ne.s32.totalorder %s26, %s29
      %p38 = scmp.eq.s32.totalorder %s21, 2
      %p39 = por %p37, %p38
      %p40 = scmp.ne.s32.totalorder %s29, %s30
      %p41 = scmp.eq.s32.totalorder %s21, 0
      %p42 = por %p40, %p41
      %p43 = scmp.ne.s32.totalorder %s29, %s30
      %p44 = scmp.eq.s32.totalorder %s22, 2
      %p45 = por %p43, %p44
      %p47 = scmp.ne.s32.totalorder %s30, %s46
      %p48 = scmp.eq.s32.totalorder %s22, 0
      %p49 = por %p47, %p48
      %s51 = sadd.s32 %s50, 1
      %p54 = scmp.eq.s32.totalorder %s16, 2
      %p55 = scmp.ne.s32.totalorder %s50, %s52
      %p56 = scmp.eq.s32.totalorder %s16, 0
      %p57 = por %p55, %p56
      %p58 = scmp.ne.s32.totalorder %s50, %s52
      %p59 = scmp.eq.s32.totalorder %s21, 2
      %p60 = por %p58, %p59
      %p61 = scmp.ne.s32.totalorder %s52, %s53
      %p62 = scmp.eq.s32.totalorder %s21, 0
      %p63 = por %p61, %p62
      %p64 = scmp.ne.s32.totalorder %s52, %s53
      %p65 = scmp.eq.s32.totalorder %s22, 2
      %p66 = por %p64, %p65
      %p68 = scmp.ne.s32.totalorder %s53, %s67
      %p69 = scmp.eq.s32.totalorder %s22, 0
      %p70 = por %p68, %p69
      %s72 = sadd.s32 %s71, 1
      %p75 = scmp.eq.s32.totalorder %s16, 2
      %p76 = scmp.ne.s32.totalorder %s71, %s73
      %p77 = scmp.eq.s32.totalorder %s16, 0
      %p78 = por %p76, %p77
      %p79 = scmp.ne.s32.totalorder %s71, %s73
      %p80 = scmp.eq.s32.totalorder %s21, 2
      %p81 = por %p79, %p80
      %p82 = scmp.ne.s32.totalorder %s73, %s74
      %p83 = scmp.eq.s32.totalorder %s21, 0
      %p84 = por %p82, %p83
      %p85 = scmp.ne.s32.totalorder %s73, %s74
      %p86 = scmp.eq.s32.totalorder %s22, 2
      %p87 = por %p85, %p86
      %p89 = scmp.ne.s32.totalorder %s74, %s88
      %p90 = scmp.eq.s32.totalorder %s22, 0
      %p91 = por %p89, %p90
      %s93 = sadd.s32 %s92, 1
      %p96 = scmp.eq.s32.totalorder %s16, 2
      %p97 = scmp.ne.s32.totalorder %s92, %s94
      %p98 = scmp.eq.s32.totalorder %s16, 0
      %p99 = por %p97, %p98
      %p100 = scmp.ne.s32.totalorder %s92, %s94
      %p101 = scmp.eq.s32.totalorder %s21, 2
      %p102 = por %p100, %p101
      %p103 = scmp.ne.s32.totalorder %s94, %s95
      %p104 = scmp.eq.s32.totalorder %s21, 0
      %p105 = por %p103, %p104
      %p106 = scmp.ne.s32.totalorder %s94, %s95
      %p107 = scmp.eq.s32.totalorder %s22, 2
      %p108 = por %p106, %p107
      %p110 = scmp.ne.s32.totalorder %s95, %s109
      %p111 = scmp.eq.s32.totalorder %s22, 0
      %p112 = por %p110, %p111
      %s114 = sadd.s32 %s113, 1
      %p117 = scmp.eq.s32.totalorder %s16, 2
      %p118 = scmp.ne.s32.totalorder %s113, %s115
      %p119 = scmp.eq.s32.totalorder %s16, 0
      %p120 = por %p118, %p119
      %p121 = scmp.ne.s32.totalorder %s113, %s115
      %p122 = scmp.eq.s32.totalorder %s21, 2
      %p123 = por %p121, %p122
      %p124 = scmp.ne.s32.totalorder %s115, %s116
      %p125 = scmp.eq.s32.totalorder %s21, 0
      %p126 = por %p124, %p125
      %p127 = scmp.ne.s32.totalorder %s115, %s116
      %p128 = scmp.eq.s32.totalorder %s22, 2
      %p129 = por %p127, %p128
      %p131 = scmp.ne.s32.totalorder %s116, %s130
      %p132 = scmp.eq.s32.totalorder %s22, 0
      %p133 = por %p131, %p132
      %s135 = sadd.s32 %s134, 1
      %p138 = scmp.eq.s32.totalorder %s16, 2
      %p139 = scmp.ne.s32.totalorder %s134, %s136
      %p140 = scmp.eq.s32.totalorder %s16, 0
      %p141 = por %p139, %p140
      %p142 = scmp.ne.s32.totalorder %s134, %s136
      %p143 = scmp.eq.s32.totalorder %s21, 2
      %p144 = por %p142, %p143
      %p145 = scmp.ne.s32.totalorder %s136, %s137
      %p146 = scmp.eq.s32.totalorder %s21, 0
      %p147 = por %p145, %p146
      %p148 = scmp.ne.s32.totalorder %s136, %s137
      %p149 = scmp.eq.s32.totalorder %s22, 2
      %p150 = por %p148, %p149
      %p152 = scmp.ne.s32.totalorder %s137, %s151
      %p153 = scmp.eq.s32.totalorder %s22, 0
      %p154 = por %p152, %p153
      %s156 = sadd.s32 %s155, 1
      %p159 = scmp.eq.s32.totalorder %s16, 2
      %p160 = scmp.ne.s32.totalorder %s155, %s157
      %p161 = scmp.eq.s32.totalorder %s16, 0
      %p162 = por %p160, %p161
      %p163 = scmp.ne.s32.totalorder %s155, %s157
      %p164 = scmp.eq.s32.totalorder %s21, 2
      %p165 = por %p163, %p164
      %p166 = scmp.ne.s32.totalorder %s157, %s158
      %p167 = scmp.eq.s32.totalorder %s21, 0
      %p168 = por %p166, %p167
      %p169 = scmp.ne.s32.totalorder %s157, %s158
      %p170 = scmp.eq.s32.totalorder %s22, 2
      %p171 = por %p169, %p170
      %p173 = scmp.ne.s32.totalorder %s158, %s172
      %p174 = scmp.eq.s32.totalorder %s22, 0
      %p175 = por %p173, %p174
      %s176 = ssub.s32 %s16, %s23
      %p177 = scmp.eq.s32.totalorder %s176, 0
      %s179 = sadd.s32 %s178, 1
      %s180 = scalar_select %p177, %s178, %s179
      %p183 = pneg %p177
      %p184 = scmp.eq.s32.totalorder %s16, 2
      %p185 = por %p183, %p184
      %p186 = scmp.ne.s32.totalorder %s178, %s181
      %p187 = scmp.eq.s32.totalorder %s16, 0
      %p188 = por %p186, %p187
      %p189 = scmp.ne.s32.totalorder %s178, %s181
      %p190 = scmp.eq.s32.totalorder %s21, 2
      %p191 = por %p189, %p190
      %p192 = scmp.ne.s32.totalorder %s181, %s182
      %p193 = scmp.eq.s32.totalorder %s21, 0
      %p194 = por %p192, %p193
      %p195 = scmp.ne.s32.totalorder %s181, %s182
      %p196 = scmp.eq.s32.totalorder %s22, 2
      %p197 = por %p195, %p196
      %p199 = scmp.ne.s32.totalorder %s182, %s198
      %p200 = scmp.eq.s32.totalorder %s22, 0
      %p201 = por %p199, %p200
      %p202 = scmp.le.s32.totalorder 1, %s16
      %p203 = scmp.lt.s32.totalorder %s16, 4
      %p204 = pnand %p202, %p203
      %p205 = pneg %p204
      // Predicated region
      $region9: #{tpu_custom_call.1} parent=5 // pred_check
        _
      $region10: #{tpu_custom_call.1} parent=5 // pred_check_branch
        %207 = sbr.rel (%p204) target = $region12
      $region11: #{tpu_custom_call.1} parent=5 // pred_region
        %s208 = ssub.s32 %s16, 1
        // Predicated region
        $region13: #{tpu_custom_call.1} parent=11 // pred_check
          %p209 = pneg %p63
        $region14: #{tpu_custom_call.1} parent=11 // pred_check_branch
          %211 = sbr.rel (%p209) target = $region16
        $region15: #{tpu_custom_call.1} parent=11 // pred_region
          _
        $region16: #{tpu_custom_call.1} parent=11 // pred_fallthru
          _
        // Predicated region
        $region17: #{tpu_custom_call.1} parent=11 // pred_check
          %p212 = pneg %p84
        $region18: #{tpu_custom_call.1} parent=11 // pred_check_branch
          %214 = sbr.rel (%p212) target = $region20
        $region19: #{tpu_custom_call.1} parent=11 // pred_region
          _
        $region20: #{tpu_custom_call.1} parent=11 // pred_fallthru
          _
        // Predicated region
        $region21: #{tpu_custom_call.1} parent=11 // pred_check
          %p215 = pneg %p105
        $region22: #{tpu_custom_call.1} parent=11 // pred_check_branch
          %217 = sbr.rel (%p215) target = $region24
        $region23: #{tpu_custom_call.1} parent=11 // pred_region
          _
        $region24: #{tpu_custom_call.1} parent=11 // pred_fallthru
          _
        // Predicated region
        $region25: #{tpu_custom_call.1} parent=11 // pred_check
          %p218 = pneg %p126
        $region26: #{tpu_custom_call.1} parent=11 // pred_check_branch
          %220 = sbr.rel (%p218) target = $region28
        $region27: #{tpu_custom_call.1} parent=11 // pred_region
          _
        $region28: #{tpu_custom_call.1} parent=11 // pred_fallthru
          _
        // Predicated region
        $region29: #{tpu_custom_call.1} parent=11 // pred_check
          %p221 = pneg %p147
        $region30: #{tpu_custom_call.1} parent=11 // pred_check_branch
          %223 = sbr.rel (%p221) target = $region32
        $region31: #{tpu_custom_call.1} parent=11 // pred_region
          _
        $region32: #{tpu_custom_call.1} parent=11 // pred_fallthru
          _
        // Predicated region
        $region33: #{tpu_custom_call.1} parent=11 // pred_check
          %p224 = pneg %p168
        $region34: #{tpu_custom_call.1} parent=11 // pred_check_branch
          %226 = sbr.rel (%p224) target = $region36
        $region35: #{tpu_custom_call.1} parent=11 // pred_region
          _
        $region36: #{tpu_custom_call.1} parent=11 // pred_fallthru
          _
      $region12: #{tpu_custom_call.1} parent=5 // pred_fallthru
        _
      %p227 = scmp.lt.s32.totalorder %s16, 3
      // Predicated region
      $region37: #{tpu_custom_call.1} parent=5 // pred_check
        %p228 = pneg %p227
      $region38: #{tpu_custom_call.1} parent=5 // pred_check_branch
        %230 = sbr.rel (%p228) target = $region40
      $region39: #{tpu_custom_call.1} parent=5 // pred_region
        // Predicated region
        $region41: #{tpu_custom_call.1} parent=39 // pred_check
          %p231 = pneg %p36
        $region42: #{tpu_custom_call.1} parent=39 // pred_check_branch
          %233 = sbr.rel (%p231) target = $region44
        $region43: #{tpu_custom_call.1} parent=39 // pred_region
          %s234 = smul.u32 16, %s16
          %p235 = scmp.lt.s32.totalorder %s234, 47
          %s236 = scalar_select %p235, %s234, 47
          %s237 = smul.addr %s236, 8
          %s238 = scalar_lea.vmem %s0, %s237
          %s239 = smul.u32 16, %s16
        $region44: #{tpu_custom_call.1} parent=39 // pred_fallthru
          _
      $region40: #{tpu_custom_call.1} parent=5 // pred_fallthru
        _
      %p240 = scmp.le.s32.totalorder 1, %s16
      %p241 = scmp.lt.s32.totalorder %s16, 4
      %p242 = pnand %p240, %p241
      %p243 = pneg %p242
      // Predicated region
      $region45: #{tpu_custom_call.1} parent=5 // pred_check
        _
      $region46: #{tpu_custom_call.1} parent=5 // pred_check_branch
        %245 = sbr.rel (%p242) target = $region48
      $region47: #{tpu_custom_call.1} parent=5 // pred_region
        %s246 = ssub.s32 %s16, 1
        %s247 = smul.u32 16, %s21
        %p248 = scmp.lt.s32.totalorder %s247, 47
        %s249 = scalar_select %p248, %s247, 47
        %s250 = smul.addr %s249, 8
        %s251 = scalar_lea.vmem %s0, %s250
        %p252 = pneg %p42
        %p253 = pneg %p39
        %p254 = pneg %p63
        %p255 = pneg %p60
        %p256 = pneg %p84
        %p257 = pneg %p81
        %p258 = pneg %p105
        %p259 = pneg %p102
        %p260 = pneg %p126
        %p261 = pneg %p123
        %p262 = pneg %p147
        %p263 = pneg %p144
        %p264 = pneg %p168
        %p265 = pneg %p165
        %p266 = pneg %p194
        %p267 = pneg %p191
        %s268 = sand.u32 %s181, 1
        %s269 = scalar_lea.sflag [#allocation3], %s268
        %s270 = sand.u32 %s181, 1
        %s271 = smul.addr %s270, 128
        %s272 = scalar_lea.vmem [#allocation2], %s271
        %s273 = smul.u32 16, %s21
        %p274 = scmp.lt.s32.totalorder %s273, 47
        %s275 = scalar_select %p274, %s273, 47
        %s276 = smul.addr %s275, 8
        %s277 = scalar_lea.vmem %s0, %s276
        %s278 = smul.u32 16, %s21
        %s279 = smul.u32 16, %s21
        %v280 = vld [vmem:[%s277] sm:$0xff]
        %v281 = vld [vmem:[%s277 + $0x8] sm:$0xff]
        %v282 = vld [vmem:[%s277 + $0x10] sm:$0xff]
        %v283 = vld [vmem:[%s277 + $0x18] sm:$0xff]
        %v284 = vld [vmem:[%s277 + $0x20] sm:$0xff]
        %v285 = vld [vmem:[%s277 + $0x28] sm:$0xff]
        %v286 = vld [vmem:[%s277 + $0x30] sm:$0xff]
        %v287 = vld [vmem:[%s277 + $0x38] sm:$0xff]
        %v288 = vld [vmem:[%s277 + $0x40] sm:$0xff]
        %v289 = vld [vmem:[%s277 + $0x48] sm:$0xff]
        %v290 = vld [vmem:[%s277 + $0x50] sm:$0xff]
        %v291 = vld [vmem:[%s277 + $0x58] sm:$0xff]
        %v292 = vld [vmem:[%s277 + $0x60] sm:$0xff]
        %v293 = vld [vmem:[%s277 + $0x68] sm:$0xff]
        %v294 = vld [vmem:[%s277 + $0x70] sm:$0xff]
        %v295 = vld [vmem:[%s277 + $0x78] sm:$0xff]
        %v296 = vld [vmem:[%s1] sm:$0xff]
        %v297 = vld [vmem:[%s1 + $0x8] sm:$0xff]
        %v298 = vld [vmem:[%s1 + $0x10] sm:$0xff]
        %v299 = vld [vmem:[%s1 + $0x18] sm:$0xff]
        %v300 = vld [vmem:[%s2] sm:$0x1]
        %v302 = vperm.slane %v300, 0
        %vm304 = vcmask 261120
        %v306 = vsel %vm304, %v280, 0
        %v309 = vsel %vm304, %v281, 0
        %v312 = vsel %vm304, %v282, 0
        %v315 = vsel %vm304, %v283, 0
        %v318 = vsel %vm304, %v284, 0
        %v321 = vsel %vm304, %v285, 0
        %v324 = vsel %vm304, %v286, 0
        %v327 = vsel %vm304, %v287, 0
        %v330 = vsel %vm304, %v288, 0
        %v333 = vsel %vm304, %v289, 0
        %v336 = vsel %vm304, %v290, 0
        %v339 = vsel %vm304, %v291, 0
        %v342 = vsel %vm304, %v292, 0
        %v345 = vsel %vm304, %v293, 0
        %v348 = vsel %vm304, %v294, 0
        %v351 = vsel %vm304, %v295, 0
        %353 = vmatpush.msra.mxu0 0.0
        %354 = vmatpush.msra.mxu0 0.0
        %355 = vmatpush.msra.mxu0 0.0
        %356 = vmatpush.msra.mxu0 0.0
        %357 = vmatpush.msra.mxu0 0.0
        %358 = vmatpush.msra.mxu0 0.0
        %359 = vmatpush.msra.mxu0 0.0
        %360 = vmatpush.msra.mxu0 0.0
        %361 = vmatpush.msra.mxu0 0.0
        %362 = vmatpush.msra.mxu0 0.0
        %363 = vmatpush.msra.mxu0 0.0
        %364 = vmatpush.msra.mxu0 0.0
        %365 = vmatpush.msra.mxu0 %v299
        %366 = vmatpush.msra.mxu0 %v298
        %367 = vmatpush.msra.mxu0 %v297
        %368 = vmatpush.msra.mxu0 %v296
        %369 = vmatmul.f32.gmra.mxu0 %v306
        %v370 = vpop.f32.mrf.mxu0
        %v371 = vadd.f32 %v302, %v370
        %372 = vmatmul.f32.gmra.mxu0 %v309
        %v373 = vpop.f32.mrf.mxu0
        %v374 = vadd.f32 %v302, %v373
        %375 = vmatmul.f32.gmra.mxu0 %v312
        %v376 = vpop.f32.mrf.mxu0
        %v377 = vadd.f32 %v302, %v376
        %378 = vmatmul.f32.gmra.mxu0 %v315
        %v379 = vpop.f32.mrf.mxu0
        %v380 = vadd.f32 %v302, %v379
        %381 = vmatmul.f32.gmra.mxu0 %v318
        %v382 = vpop.f32.mrf.mxu0
        %v383 = vadd.f32 %v302, %v382
        %384 = vmatmul.f32.gmra.mxu0 %v321
        %v385 = vpop.f32.mrf.mxu0
        %v386 = vadd.f32 %v302, %v385
        %387 = vmatmul.f32.gmra.mxu0 %v324
        %v388 = vpop.f32.mrf.mxu0
        %v389 = vadd.f32 %v302, %v388
        %390 = vmatmul.f32.gmra.mxu0 %v327
        %v391 = vpop.f32.mrf.mxu0
        %v392 = vadd.f32 %v302, %v391
        %393 = vmatmul.f32.gmra.mxu0 %v330
        %v394 = vpop.f32.mrf.mxu0
        %v395 = vadd.f32 %v302, %v394
        %396 = vmatmul.f32.gmra.mxu0 %v333
        %v397 = vpop.f32.mrf.mxu0
        %v398 = vadd.f32 %v302, %v397
        %399 = vmatmul.f32.gmra.mxu0 %v336
        %v400 = vpop.f32.mrf.mxu0
        %v401 = vadd.f32 %v302, %v400
        %402 = vmatmul.f32.gmra.mxu0 %v339
        %v403 = vpop.f32.mrf.mxu0
        %v404 = vadd.f32 %v302, %v403
        %405 = vmatmul.f32.gmra.mxu0 %v342
        %v406 = vpop.f32.mrf.mxu0
        %v407 = vadd.f32 %v302, %v406
        %408 = vmatmul.f32.gmra.mxu0 %v345
        %v409 = vpop.f32.mrf.mxu0
        %v410 = vadd.f32 %v302, %v409
        %411 = vmatmul.f32.gmra.mxu0 %v348
        %v412 = vpop.f32.mrf.mxu0
        %v413 = vadd.f32 %v302, %v412
        %414 = vmatmul.f32.gmra.mxu0 %v351
        %v415 = vpop.f32.mrf.mxu0
        %v416 = vadd.f32 %v302, %v415
        %417 = vdwg.mxu0
        %v418 = vmax.f32 %v371, 0.0
        %v419 = vmax.f32 %v374, 0.0
        %v420 = vmax.f32 %v377, 0.0
        %v421 = vmax.f32 %v380, 0.0
        %v422 = vmax.f32 %v383, 0.0
        %v423 = vmax.f32 %v386, 0.0
        %v424 = vmax.f32 %v389, 0.0
        %v425 = vmax.f32 %v392, 0.0
        %v426 = vmax.f32 %v395, 0.0
        %v427 = vmax.f32 %v398, 0.0
        %v428 = vmax.f32 %v401, 0.0
        %v429 = vmax.f32 %v404, 0.0
        %v430 = vmax.f32 %v407, 0.0
        %v431 = vmax.f32 %v410, 0.0
        %v432 = vmax.f32 %v413, 0.0
        %v433 = vmax.f32 %v416, 0.0
        %v434 = vld [vmem:[%s3] sm:$0xff]
        %v435 = vld [vmem:[%s4] sm:$0x1]
        %v437 = vperm.slane %v435, 0
        %vm439 = vcmask 64512
        %v441 = vsel %vm439, %v418, 0
        %v444 = vsel %vm439, %v419, 0
        %v447 = vsel %vm439, %v420, 0
        %v450 = vsel %vm439, %v421, 0
        %v453 = vsel %vm439, %v422, 0
        %v456 = vsel %vm439, %v423, 0
        %v459 = vsel %vm439, %v424, 0
        %v462 = vsel %vm439, %v425, 0
        %v465 = vsel %vm439, %v426, 0
        %v468 = vsel %vm439, %v427, 0
        %v471 = vsel %vm439, %v428, 0
        %v474 = vsel %vm439, %v429, 0
        %v477 = vsel %vm439, %v430, 0
        %v480 = vsel %vm439, %v431, 0
        %v483 = vsel %vm439, %v432, 0
        %v486 = vsel %vm439, %v433, 0
        %488 = vmatpush.msra.mxu0 0.0
        %489 = vmatpush.msra.mxu0 0.0
        %490 = vmatpush.msra.mxu0 0.0
        %491 = vmatpush.msra.mxu0 0.0
        %492 = vmatpush.msra.mxu0 0.0
        %493 = vmatpush.msra.mxu0 0.0
        %494 = vmatpush.msra.mxu0 0.0
        %495 = vmatpush.msra.mxu0 0.0
        %496 = vmatpush.msra.mxu0 0.0
        %497 = vmatpush.msra.mxu0 0.0
        %498 = vmatpush.msra.mxu0 0.0
        %499 = vmatpush.msra.mxu0 0.0
        %500 = vmatpush.msra.mxu0 0.0
        %501 = vmatpush.msra.mxu0 0.0
        %502 = vmatpush.msra.mxu0 0.0
        %503 = vmatpush.msra.mxu0 %v434
        %504 = vmatmul.f32.gmra.mxu0 %v441
        %v505 = vpop.f32.mrf.mxu0
        %v506 = vadd.f32 %v437, %v505
        %507 = vmatmul.f32.gmra.mxu0 %v444
        %v508 = vpop.f32.mrf.mxu0
        %v509 = vadd.f32 %v437, %v508
        %510 = vmatmul.f32.gmra.mxu0 %v447
        %v511 = vpop.f32.mrf.mxu0
        %v512 = vadd.f32 %v437, %v511
        %513 = vmatmul.f32.gmra.mxu0 %v450
        %v514 = vpop.f32.mrf.mxu0
        %v515 = vadd.f32 %v437, %v514
        %516 = vmatmul.f32.gmra.mxu0 %v453
        %v517 = vpop.f32.mrf.mxu0
        %v518 = vadd.f32 %v437, %v517
        %519 = vmatmul.f32.gmra.mxu0 %v456
        %v520 = vpop.f32.mrf.mxu0
        %v521 = vadd.f32 %v437, %v520
        %522 = vmatmul.f32.gmra.mxu0 %v459
        %v523 = vpop.f32.mrf.mxu0
        %v524 = vadd.f32 %v437, %v523
        %525 = vmatmul.f32.gmra.mxu0 %v462
        %v526 = vpop.f32.mrf.mxu0
        %v527 = vadd.f32 %v437, %v526
        %528 = vmatmul.f32.gmra.mxu0 %v465
        %v529 = vpop.f32.mrf.mxu0
        %v530 = vadd.f32 %v437, %v529
        %531 = vmatmul.f32.gmra.mxu0 %v468
        %v532 = vpop.f32.mrf.mxu0
        %v533 = vadd.f32 %v437, %v532
        %534 = vmatmul.f32.gmra.mxu0 %v471
        %v535 = vpop.f32.mrf.mxu0
        %v536 = vadd.f32 %v437, %v535
        %537 = vmatmul.f32.gmra.mxu0 %v474
        %v538 = vpop.f32.mrf.mxu0
        %v539 = vadd.f32 %v437, %v538
        %540 = vmatmul.f32.gmra.mxu0 %v477
        %v541 = vpop.f32.mrf.mxu0
        %v542 = vadd.f32 %v437, %v541
        %543 = vmatmul.f32.gmra.mxu0 %v480
        %v544 = vpop.f32.mrf.mxu0
        %v545 = vadd.f32 %v437, %v544
        %546 = vmatmul.f32.gmra.mxu0 %v483
        %v547 = vpop.f32.mrf.mxu0
        %v548 = vadd.f32 %v437, %v547
        %549 = vmatmul.f32.gmra.mxu0 %v486
        %v550 = vpop.f32.mrf.mxu0
        %v551 = vadd.f32 %v437, %v550
        %552 = vdwg.mxu0
        %v553 = vmax.f32 %v506, 0.0
        %v554 = vmax.f32 %v509, 0.0
        %v555 = vmax.f32 %v512, 0.0
        %v556 = vmax.f32 %v515, 0.0
        %v557 = vmax.f32 %v518, 0.0
        %v558 = vmax.f32 %v521, 0.0
        %v559 = vmax.f32 %v524, 0.0
        %v560 = vmax.f32 %v527, 0.0
        %v561 = vmax.f32 %v530, 0.0
        %v562 = vmax.f32 %v533, 0.0
        %v563 = vmax.f32 %v536, 0.0
        %v564 = vmax.f32 %v539, 0.0
        %v565 = vmax.f32 %v542, 0.0
        %v566 = vmax.f32 %v545, 0.0
        %v567 = vmax.f32 %v548, 0.0
        %v568 = vmax.f32 %v551, 0.0
        %v569 = vld [vmem:[%s5] sm:$0xff]
        %v570 = vld [vmem:[%s6] sm:$0x1]
        %v572 = vperm.slane %v570, 0
        %v575 = vsel %vm439, %v553, 0
        %v578 = vsel %vm439, %v554, 0
        %v581 = vsel %vm439, %v555, 0
        %v584 = vsel %vm439, %v556, 0
        %v587 = vsel %vm439, %v557, 0
        %v590 = vsel %vm439, %v558, 0
        %v593 = vsel %vm439, %v559, 0
        %v596 = vsel %vm439, %v560, 0
        %v599 = vsel %vm439, %v561, 0
        %v602 = vsel %vm439, %v562, 0
        %v605 = vsel %vm439, %v563, 0
        %v608 = vsel %vm439, %v564, 0
        %v611 = vsel %vm439, %v565, 0
        %v614 = vsel %vm439, %v566, 0
        %v617 = vsel %vm439, %v567, 0
        %v620 = vsel %vm439, %v568, 0
        %622 = vmatpush.msra.mxu0 0.0
        %623 = vmatpush.msra.mxu0 0.0
        %624 = vmatpush.msra.mxu0 0.0
        %625 = vmatpush.msra.mxu0 0.0
        %626 = vmatpush.msra.mxu0 0.0
        %627 = vmatpush.msra.mxu0 0.0
        %628 = vmatpush.msra.mxu0 0.0
        %629 = vmatpush.msra.mxu0 0.0
        %630 = vmatpush.msra.mxu0 0.0
        %631 = vmatpush.msra.mxu0 0.0
        %632 = vmatpush.msra.mxu0 0.0
        %633 = vmatpush.msra.mxu0 0.0
        %634 = vmatpush.msra.mxu0 0.0
        %635 = vmatpush.msra.mxu0 0.0
        %636 = vmatpush.msra.mxu0 0.0
        %637 = vmatpush.msra.mxu0 %v569
        %638 = vmatmul.f32.gmra.mxu0 %v575
        %v639 = vpop.f32.mrf.mxu0
        %v640 = vadd.f32 %v572, %v639
        %641 = vmatmul.f32.gmra.mxu0 %v578
        %v642 = vpop.f32.mrf.mxu0
        %v643 = vadd.f32 %v572, %v642
        %644 = vmatmul.f32.gmra.mxu0 %v581
        %v645 = vpop.f32.mrf.mxu0
        %v646 = vadd.f32 %v572, %v645
        %647 = vmatmul.f32.gmra.mxu0 %v584
        %v648 = vpop.f32.mrf.mxu0
        %v649 = vadd.f32 %v572, %v648
        %650 = vmatmul.f32.gmra.mxu0 %v587
        %v651 = vpop.f32.mrf.mxu0
        %v652 = vadd.f32 %v572, %v651
        %653 = vmatmul.f32.gmra.mxu0 %v590
        %v654 = vpop.f32.mrf.mxu0
        %v655 = vadd.f32 %v572, %v654
        %656 = vmatmul.f32.gmra.mxu0 %v593
        %v657 = vpop.f32.mrf.mxu0
        %v658 = vadd.f32 %v572, %v657
        %659 = vmatmul.f32.gmra.mxu0 %v596
        %v660 = vpop.f32.mrf.mxu0
        %v661 = vadd.f32 %v572, %v660
        %662 = vmatmul.f32.gmra.mxu0 %v599
        %v663 = vpop.f32.mrf.mxu0
        %v664 = vadd.f32 %v572, %v663
        %665 = vmatmul.f32.gmra.mxu0 %v602
        %v666 = vpop.f32.mrf.mxu0
        %v667 = vadd.f32 %v572, %v666
        %668 = vmatmul.f32.gmra.mxu0 %v605
        %v669 = vpop.f32.mrf.mxu0
        %v670 = vadd.f32 %v572, %v669
        %671 = vmatmul.f32.gmra.mxu0 %v608
        %v672 = vpop.f32.mrf.mxu0
        %v673 = vadd.f32 %v572, %v672
        %674 = vmatmul.f32.gmra.mxu0 %v611
        %v675 = vpop.f32.mrf.mxu0
        %v676 = vadd.f32 %v572, %v675
        %677 = vmatmul.f32.gmra.mxu0 %v614
        %v678 = vpop.f32.mrf.mxu0
        %v679 = vadd.f32 %v572, %v678
        %680 = vmatmul.f32.gmra.mxu0 %v617
        %v681 = vpop.f32.mrf.mxu0
        %v682 = vadd.f32 %v572, %v681
        %683 = vmatmul.f32.gmra.mxu0 %v620
        %v684 = vpop.f32.mrf.mxu0
        %v685 = vadd.f32 %v572, %v684
        %686 = vdwg.mxu0
        %687 = vmax.xlane.f32.xlu0 %v640
        %v688 = vpop.xlane.xlu0 %687
        %689 = vmax.xlane.f32.xlu0 %v643
        %v690 = vpop.xlane.xlu0 %689
        %691 = vmax.xlane.f32.xlu0 %v646
        %v692 = vpop.xlane.xlu0 %691
        %693 = vmax.xlane.f32.xlu0 %v649
        %v694 = vpop.xlane.xlu0 %693
        %695 = vmax.xlane.f32.xlu0 %v652
        %v696 = vpop.xlane.xlu0 %695
        %697 = vmax.xlane.f32.xlu0 %v655
        %v698 = vpop.xlane.xlu0 %697
        %699 = vmax.xlane.f32.xlu0 %v658
        %v700 = vpop.xlane.xlu0 %699
        %701 = vmax.xlane.f32.xlu0 %v661
        %v702 = vpop.xlane.xlu0 %701
        %703 = vmax.xlane.f32.xlu0 %v664
        %v704 = vpop.xlane.xlu0 %703
        %705 = vmax.xlane.f32.xlu0 %v667
        %v706 = vpop.xlane.xlu0 %705
        %707 = vmax.xlane.f32.xlu0 %v670
        %v708 = vpop.xlane.xlu0 %707
        %709 = vmax.xlane.f32.xlu0 %v673
        %v710 = vpop.xlane.xlu0 %709
        %711 = vmax.xlane.f32.xlu0 %v676
        %v712 = vpop.xlane.xlu0 %711
        %713 = vmax.xlane.f32.xlu0 %v679
        %v714 = vpop.xlane.xlu0 %713
        %715 = vmax.xlane.f32.xlu0 %v682
        %v716 = vpop.xlane.xlu0 %715
        %717 = vmax.xlane.f32.xlu0 %v685
        %v718 = vpop.xlane.xlu0 %717
        %v719 = vsub.f32 %v640, %v688
        %v720 = vsub.f32 %v643, %v690
        %v721 = vsub.f32 %v646, %v692
        %v722 = vsub.f32 %v649, %v694
        %v723 = vsub.f32 %v652, %v696
        %v724 = vsub.f32 %v655, %v698
        %v725 = vsub.f32 %v658, %v700
        %v726 = vsub.f32 %v661, %v702
        %v727 = vsub.f32 %v664, %v704
        %v728 = vsub.f32 %v667, %v706
        %v729 = vsub.f32 %v670, %v708
        %v730 = vsub.f32 %v673, %v710
        %v731 = vsub.f32 %v676, %v712
        %v732 = vsub.f32 %v679, %v714
        %v733 = vsub.f32 %v682, %v716
        %v734 = vsub.f32 %v685, %v718
        %v735 = vmul.f32 %v719, 1.442695
        %v736 = vpow.pop %v735
        %v737 = vmul.f32 %v720, 1.442695
        %v738 = vpow.pop %v737
        %v739 = vmul.f32 %v721, 1.442695
        %v740 = vpow.pop %v739
        %v741 = vmul.f32 %v722, 1.442695
        %v742 = vpow.pop %v741
        %v743 = vmul.f32 %v723, 1.442695
        %v744 = vpow.pop %v743
        %v745 = vmul.f32 %v724, 1.442695
        %v746 = vpow.pop %v745
        %v747 = vmul.f32 %v725, 1.442695
        %v748 = vpow.pop %v747
        %v749 = vmul.f32 %v726, 1.442695
        %v750 = vpow.pop %v749
        %v751 = vmul.f32 %v727, 1.442695
        %v752 = vpow.pop %v751
        %v753 = vmul.f32 %v728, 1.442695
        %v754 = vpow.pop %v753
        %v755 = vmul.f32 %v729, 1.442695
        %v756 = vpow.pop %v755
        %v757 = vmul.f32 %v730, 1.442695
        %v758 = vpow.pop %v757
        %v759 = vmul.f32 %v731, 1.442695
        %v760 = vpow.pop %v759
        %v761 = vmul.f32 %v732, 1.442695
        %v762 = vpow.pop %v761
        %v763 = vmul.f32 %v733, 1.442695
        %v764 = vpow.pop %v763
        %v765 = vmul.f32 %v734, 1.442695
        %v766 = vpow.pop %v765
        %767 = vadd.xlane.f32.xlu0 %v736
        %v768 = vpop.xlane.xlu0 %767
        %769 = vadd.xlane.f32.xlu0 %v738
        %v770 = vpop.xlane.xlu0 %769
        %771 = vadd.xlane.f32.xlu0 %v740
        %v772 = vpop.xlane.xlu0 %771
        %773 = vadd.xlane.f32.xlu0 %v742
        %v774 = vpop.xlane.xlu0 %773
        %775 = vadd.xlane.f32.xlu0 %v744
        %v776 = vpop.xlane.xlu0 %775
        %777 = vadd.xlane.f32.xlu0 %v746
        %v778 = vpop.xlane.xlu0 %777
        %779 = vadd.xlane.f32.xlu0 %v748
        %v780 = vpop.xlane.xlu0 %779
        %781 = vadd.xlane.f32.xlu0 %v750
        %v782 = vpop.xlane.xlu0 %781
        %783 = vadd.xlane.f32.xlu0 %v752
        %v784 = vpop.xlane.xlu0 %783
        %785 = vadd.xlane.f32.xlu0 %v754
        %v786 = vpop.xlane.xlu0 %785
        %787 = vadd.xlane.f32.xlu0 %v756
        %v788 = vpop.xlane.xlu0 %787
        %789 = vadd.xlane.f32.xlu0 %v758
        %v790 = vpop.xlane.xlu0 %789
        %791 = vadd.xlane.f32.xlu0 %v760
        %v792 = vpop.xlane.xlu0 %791
        %793 = vadd.xlane.f32.xlu0 %v762
        %v794 = vpop.xlane.xlu0 %793
        %795 = vadd.xlane.f32.xlu0 %v764
        %v796 = vpop.xlane.xlu0 %795
        %797 = vadd.xlane.f32.xlu0 %v766
        %v798 = vpop.xlane.xlu0 %797
        %v799 = vrcp.pop %v768
        %v800 = vrcp.pop %v770
        %v801 = vrcp.pop %v772
        %v802 = vrcp.pop %v774
        %v803 = vrcp.pop %v776
        %v804 = vrcp.pop %v778
        %v805 = vrcp.pop %v780
        %v806 = vrcp.pop %v782
        %v807 = vrcp.pop %v784
        %v808 = vrcp.pop %v786
        %v809 = vrcp.pop %v788
        %v810 = vrcp.pop %v790
        %v811 = vrcp.pop %v792
        %v812 = vrcp.pop %v794
        %v813 = vrcp.pop %v796
        %v814 = vrcp.pop %v798
        %v815 = vmul.f32 %v768, %v799
        %v816 = vmul.f32 %v770, %v800
        %v817 = vmul.f32 %v772, %v801
        %v818 = vmul.f32 %v774, %v802
        %v819 = vmul.f32 %v776, %v803
        %v820 = vmul.f32 %v778, %v804
        %v821 = vmul.f32 %v780, %v805
        %v822 = vmul.f32 %v782, %v806
        %v823 = vmul.f32 %v784, %v807
        %v824 = vmul.f32 %v786, %v808
        %v825 = vmul.f32 %v788, %v809
        %v826 = vmul.f32 %v790, %v810
        %v827 = vmul.f32 %v792, %v811
        %v828 = vmul.f32 %v794, %v812
        %v829 = vmul.f32 %v796, %v813
        %v830 = vmul.f32 %v798, %v814
        %v831 = vsub.f32 2.0, %v815
        %v832 = vsub.f32 2.0, %v816
        %v833 = vsub.f32 2.0, %v817
        %v834 = vsub.f32 2.0, %v818
        %v835 = vsub.f32 2.0, %v819
        %v836 = vsub.f32 2.0, %v820
        %v837 = vsub.f32 2.0, %v821
        %v838 = vsub.f32 2.0, %v822
        %v839 = vsub.f32 2.0, %v823
        %v840 = vsub.f32 2.0, %v824
        %v841 = vsub.f32 2.0, %v825
        %v842 = vsub.f32 2.0, %v826
        %v843 = vsub.f32 2.0, %v827
        %v844 = vsub.f32 2.0, %v828
        %v845 = vsub.f32 2.0, %v829
        %v846 = vsub.f32 2.0, %v830
        %v847 = vmul.f32 %v799, %v831
        %v848 = vmul.f32 %v800, %v832
        %v849 = vmul.f32 %v801, %v833
        %v850 = vmul.f32 %v802, %v834
        %v851 = vmul.f32 %v803, %v835
        %v852 = vmul.f32 %v804, %v836
        %v853 = vmul.f32 %v805, %v837
        %v854 = vmul.f32 %v806, %v838
        %v855 = vmul.f32 %v807, %v839
        %v856 = vmul.f32 %v808, %v840
        %v857 = vmul.f32 %v809, %v841
        %v858 = vmul.f32 %v810, %v842
        %v859 = vmul.f32 %v811, %v843
        %v860 = vmul.f32 %v812, %v844
        %v861 = vmul.f32 %v813, %v845
        %v862 = vmul.f32 %v814, %v846
        %v863 = vmul.f32 %v736, %v847
        %v864 = vmul.f32 %v738, %v848
        %v865 = vmul.f32 %v740, %v849
        %v866 = vmul.f32 %v742, %v850
        %v867 = vmul.f32 %v744, %v851
        %v868 = vmul.f32 %v746, %v852
        %v869 = vmul.f32 %v748, %v853
        %v870 = vmul.f32 %v750, %v854
        %v871 = vmul.f32 %v752, %v855
        %v872 = vmul.f32 %v754, %v856
        %v873 = vmul.f32 %v756, %v857
        %v874 = vmul.f32 %v758, %v858
        %v875 = vmul.f32 %v760, %v859
        %v876 = vmul.f32 %v762, %v860
        %v877 = vmul.f32 %v764, %v861
        %v878 = vmul.f32 %v766, %v862
        %879 = vst [vmem:[%s272] sm:$0xff] %v863
        %880 = vst [vmem:[%s272 + $0x8] sm:$0xff] %v864
        %881 = vst [vmem:[%s272 + $0x10] sm:$0xff] %v865
        %882 = vst [vmem:[%s272 + $0x18] sm:$0xff] %v866
        %883 = vst [vmem:[%s272 + $0x20] sm:$0xff] %v867
        %884 = vst [vmem:[%s272 + $0x28] sm:$0xff] %v868
        %885 = vst [vmem:[%s272 + $0x30] sm:$0xff] %v869
        %886 = vst [vmem:[%s272 + $0x38] sm:$0xff] %v870
        %887 = vst [vmem:[%s272 + $0x40] sm:$0xff] %v871
        %888 = vst [vmem:[%s272 + $0x48] sm:$0xff] %v872
        %889 = vst [vmem:[%s272 + $0x50] sm:$0xff] %v873
        %890 = vst [vmem:[%s272 + $0x58] sm:$0xff] %v874
        %891 = vst [vmem:[%s272 + $0x60] sm:$0xff] %v875
        %892 = vst [vmem:[%s272 + $0x68] sm:$0xff] %v876
        %893 = vst [vmem:[%s272 + $0x70] sm:$0xff] %v877
        %894 = vst [vmem:[%s272 + $0x78] sm:$0xff] %v878
        %s895 = sand.u32 %s181, 1
        %s896 = scalar_lea.sflag [#allocation3], %s895
        %s897 = sand.u32 %s181, 1
        %s898 = smul.addr %s897, 128
        %s899 = scalar_lea.vmem [#allocation2], %s898
        // Predicated region
        $region49: #{tpu_custom_call.1} parent=47 // pred_check
          %p900 = pneg %p191
        $region50: #{tpu_custom_call.1} parent=47 // pred_check_branch
          %902 = sbr.rel (%p900) target = $region52
        $region51: #{tpu_custom_call.1} parent=47 // pred_region
          %s903 = smul.u32 16, %s21
          %905 = vsyncadd %s896, 0
          %s906 = smul.addr %s903, 8
          %s907 = scalar_lea.hbm %s7, %s906
          %s908 = sshll.u32 %s899, 4
          %s909 = int_to_ptr.vmem [resolvable:$true] %s908
          %s910 = sshll.u32 %s907, 4
          %s911 = int_to_ptr.hbm [resolvable:$true] %s910
          %916 = dma.vmem_to_hbm [thread:$0]  %s909, 2048, %s911, %s896, 128, 128, 8
        $region52: #{tpu_custom_call.1} parent=47 // pred_fallthru
          _
      $region48: #{tpu_custom_call.1} parent=5 // pred_fallthru
        _
      %p917 = scmp.le.s32.totalorder 2, %s16
      // Predicated region
      $region53: #{tpu_custom_call.1} parent=5 // pred_check
        %p918 = pneg %p917
      $region54: #{tpu_custom_call.1} parent=5 // pred_check_branch
        %920 = sbr.rel (%p918) target = $region56
      $region55: #{tpu_custom_call.1} parent=5 // pred_region
        %s921 = ssub.s32 %s16, 2
        // Predicated region
        $region57: #{tpu_custom_call.1} parent=55 // pred_check
          %p922 = pneg %p197
        $region58: #{tpu_custom_call.1} parent=55 // pred_check_branch
          %924 = sbr.rel (%p922) target = $region60
        $region59: #{tpu_custom_call.1} parent=55 // pred_region
          %s925 = sand.u32 %s182, 1
          %s926 = scalar_lea.sflag [#allocation3], %s925
          %s927 = sand.u32 %s182, 1
          %s928 = smul.addr %s927, 128
          %s929 = scalar_lea.vmem [#allocation2], %s928
          %931 = dma.done %s926, 2048
        $region60: #{tpu_custom_call.1} parent=55 // pred_fallthru
          _
      $region56: #{tpu_custom_call.1} parent=5 // pred_fallthru
        _
    $region6: #{tpu_custom_call.1} parent=1 // loop_footer
      %s20 = sadd.s32 1, %s16
    $region7: #{tpu_custom_call.1} parent=1 // loop_footer_branch
      %15 = sbr.rel target = $region3
    $region8: #{tpu_custom_call.1} parent=1 // loop_exit
      _
    %932 = vsyncpa [#allocation3], 1
    %s933 = scalar_lea.sflag [#allocation3], 1
    %934 = vsyncpa %s933, 1

</llo_original>
